<compile_context>
chip_gen: v5e
topology: v5e:2x2
jax: 0.10.0
libtpu: 0.0.40
codegen_flags: <defaults>
</compile_context>

<pallas_src>
import jax
import jax.numpy as jnp
from jax.experimental import pallas as pl
from jax.experimental.pallas import tpu as pltpu

_LANE = 128
_SUBLANE = 8
_VMEM_BUFFER_CAP = 24 * 1024 * 1024      # max bytes of double-buffered in+out
_VMEM_RAISE_THRESHOLD = 12 * 1024 * 1024  # above this, raise scoped VMEM limit


def _round_up(a: int, b: int) -> int:
    return (a + b - 1) // b * b


def _linear_kernel(x_ref, wb_ref, o_ref):
    # y = x * w + b  (in_features == out_features == 1 -> scalar FMA on VPU).
    w = wb_ref[0]
    b = wb_ref[1]
    y = x_ref[...].astype(jnp.float32) * w + b
    o_ref[...] = y.astype(o_ref.dtype)


def _linear_ref(x, weight, bias, out_dtype):
    y = x.astype(jnp.float32) @ weight.astype(jnp.float32).T + bias.astype(jnp.float32)
    return y.astype(out_dtype)


def regression_model_forward(
    x,
    weight,
    bias,
    *,
    tile_rows: int = 4096,
    force_pallas: bool = False,
    min_pallas_elems: int = 4096,
):
    """x: (N, 1), weight: (1, 1), bias: (1,) -> (N, 1), same math as nn.Linear(1, 1)."""
    n = x.shape[0]
    out_dtype = x.dtype if jnp.issubdtype(x.dtype, jnp.floating) else jnp.float32

    # For tiny batches the pallas_call fixed cost dominates -> let XLA fuse it.
    if not force_pallas and n < min_pallas_elems:
        return _linear_ref(x, weight, bias, out_dtype)

    in_itemsize = jnp.dtype(x.dtype).itemsize
    out_itemsize = jnp.dtype(out_dtype).itemsize

    # Sublane multiple for the most tightly packed dtype involved (8 f32, 16 bf16).
    mult = _SUBLANE * max(1, 4 // min(in_itemsize, out_itemsize))

    # ---- lane-dense layout (rows, 128); rows rounded to the sublane only ----
    rows = max(_round_up(pl.cdiv(n, _LANE), mult), mult)
    padded = rows * _LANE
    pad = padded - n

    # ---- tile-size selection ------------------------------------------------
    tr = _round_up(max(tile_rows, mult), mult)
    # Keep double-buffered in+out under the VMEM cap (safe on every generation).
    max_tr = max((_VMEM_BUFFER_CAP // (2 * _LANE * (in_itemsize + out_itemsize))
                  ) // mult * mult, mult)
    tr = min(tr, max_tr)
    tr = min(tr, rows)
    # If the data spans >1 tile's worth anyway, keep >=2 grid steps so the
    # "parallel" grid axis can be sharded across both v7x TensorCores.
    if rows >= 2 * mult:
        tr = min(tr, _round_up(pl.cdiv(rows, 2), mult))

    grid = (pl.cdiv(rows, tr),)

    vmem_need = 2 * tr * _LANE * (in_itemsize + out_itemsize)  # in+out, double-buffered
    vmem_limit = 32 * 1024 * 1024 if vmem_need > _VMEM_RAISE_THRESHOLD else None

    # ---- operands -------------------------------------------------------------
    flat = x.reshape(-1)
    if pad:
        flat = jnp.pad(flat, (0, pad))  # tail-only pad (< mult*128 elems); fuses
    x2d = flat.reshape(rows, _LANE)     # last dim = 128 -> unmasked full-lane vst

    # Pack weight & bias into one small SMEM operand.
    wb = jnp.concatenate([weight.reshape(-1), bias.reshape(-1)]).astype(jnp.float32)

    out2d = pl.pallas_call(
        _linear_kernel,
        out_shape=jax.ShapeDtypeStruct((rows, _LANE), out_dtype),
        grid=grid,
        in_specs=[
            pl.BlockSpec((tr, _LANE), lambda i: (i, 0)),  # x tile (VMEM, pipelined)
            pl.BlockSpec(
                (2,), lambda i: (0,), memory_space=pltpu.MemorySpace.SMEM
            ),  # [w, b]
        ],
        out_specs=pl.BlockSpec((tr, _LANE), lambda i: (i, 0)),
        compiler_params=pltpu.CompilerParams(
            dimension_semantics=("parallel",),    # lets v7x use both TensorCores
            allow_input_fusion=[True, False],     # fuse pad/reshape into input DMA
            vmem_limit_bytes=vmem_limit,
        ),
        cost_estimate=pl.CostEstimate(
            flops=2 * padded,
            transcendentals=0,
            bytes_accessed=padded * (in_itemsize + out_itemsize),
        ),
    )(x2d, wb)

    flat_out = out2d.reshape(-1)
    if pad:
        flat_out = flat_out[:n]          # only needed when n % 128 != 0
    return flat_out.reshape(n, 1)


if __name__ == "__main__":
    # Same input data as the PyTorch script (x.view(-1, 1)).
    x = jnp.array(
        [12.4, 14.3, 14.5, 14.9, 16.1, 16.9, 16.5, 15.4, 17.0, 17.9, 18.8,
         20.3, 22.4, 19.4, 15.5, 16.7, 17.3, 18.4, 19.2, 17.4, 19.5, 19.7,
         21.2],
        dtype=jnp.float32,
    ).reshape(-1, 1)

    # Deterministic parameter init (mimics nn.Linear's uniform(-bound, bound)
    # for in_features=1, bound = 1/sqrt(1) = 1).
    key = jax.random.PRNGKey(0)
    kw, kb, kx1, kx2 = jax.random.split(key, 4)
    weight = jax.random.uniform(kw, (1, 1), jnp.float32, minval=-1.0, maxval=1.0)
    bias = jax.random.uniform(kb, (1,), jnp.float32, minval=-1.0, maxval=1.0)

    # 1) Real N=23 workload, forced through the Pallas kernel (single ragged tile).
    y_small = jax.block_until_ready(
        regression_model_forward(x, weight, bias, force_pallas=True)
    )
    ref_small = x @ weight.T + bias
    assert y_small.shape == x.shape
    assert y_small.dtype == jnp.float32
    assert jnp.allclose(y_small, ref_small, atol=1e-6, rtol=1e-6)

    # 2) Multi-tile streaming grid with a ragged last block (rows=24, tr=8, grid=3).
    x_mid = jax.random.uniform(kx1, (2500, 1), jnp.float32, minval=10.0, maxval=30.0)
    y_mid = jax.block_until_ready(
        regression_model_forward(x_mid, weight, bias, tile_rows=8, force_pallas=True)
    )
    ref_mid = x_mid @ weight.T + bias
    assert y_mid.shape == x_mid.shape
    assert jnp.allclose(y_mid, ref_mid, atol=1e-5, rtol=1e-5)

    # 3) Default dispatch with n % 128 == 0 (no pad / no slice; >=2 grid steps).
    x_big = jax.random.uniform(kx2, (8192, 1), jnp.float32, minval=10.0, maxval=30.0)
    y_big = jax.block_until_ready(regression_model_forward(x_big, weight, bias))
    ref_big = x_big @ weight.T + bias
    assert y_big.shape == x_big.shape
    assert jnp.allclose(y_big, ref_big, atol=1e-5, rtol=1e-5)

    # 4) Tiny-batch default dispatch (skips the kernel; XLA fuses x*w+b).
    y_disp = jax.block_until_ready(regression_model_forward(x, weight, bias))
    assert jnp.allclose(y_disp, ref_small, atol=1e-6, rtol=1e-6)

    print("KERNEL_OK")
</pallas_src>

<mosaic_0001>
module attributes {stable_mosaic.version = 11 : i64} {
  func.func @_linear_kernel(%arg0: i32, %arg1: memref<8x128xf32, #tpu.memory_space<vmem>>, %arg2: memref<2xf32, #tpu.memory_space<smem>>, %arg3: memref<8x128xf32, #tpu.memory_space<vmem>>) attributes {dimension_semantics = [#tpu.dimension_semantics<parallel>], iteration_bounds = array<i64: 1>, scalar_prefetch = 0 : i64, scratch_operands = 0 : i64, tpu.core_type = #tpu.core_type<tc>, window_params = [{transform_indices = @transform_0, window_bounds = array<i64: 8, 128>}, {transform_indices = @transform_1, window_bounds = array<i64: 2>}, {transform_indices = @transform_2, window_bounds = array<i64: 8, 128>}]} {
    %c0 = arith.constant 0 : index
    %0 = memref.load %arg2[%c0] : memref<2xf32, #tpu.memory_space<smem>>
    %c1 = arith.constant 1 : index
    %1 = memref.load %arg2[%c1] : memref<2xf32, #tpu.memory_space<smem>>
    %c0_0 = arith.constant 0 : index
    %c0_1 = arith.constant 0 : index
    %2 = vector.load %arg1[%c0_0, %c0_1] : memref<8x128xf32, #tpu.memory_space<vmem>>, vector<8x128xf32>
    %3 = vector.broadcast %0 : f32 to vector<8x128xf32>
    %4 = arith.mulf %2, %3 : vector<8x128xf32>
    %5 = vector.broadcast %1 : f32 to vector<8x128xf32>
    %6 = arith.addf %4, %5 : vector<8x128xf32>
    %c0_2 = arith.constant 0 : index
    %c0_3 = arith.constant 0 : index
    %7 = vector.load %arg3[%c0_2, %c0_3] : memref<8x128xf32, #tpu.memory_space<vmem>>, vector<8x128xf32>
    tpu.vector_store %arg3[%c0_2, %c0_3], %6 {strides = array<i32>} : memref<8x128xf32, #tpu.memory_space<vmem>>, vector<8x128xf32>,
    return
  }
  func.func @transform_0(%arg0: i32) -> (i32, i32) {
    %c0_i32 = arith.constant 0 : i32
    %c0_i32_0 = arith.constant 0 : i32
    return %arg0, %c0_i32 : i32, i32
  }
  func.func @transform_1(%arg0: i32) -> i32 {
    %c0_i32 = arith.constant 0 : i32
    %c0_i32_0 = arith.constant 0 : i32
    return %c0_i32 : i32
  }
  func.func @transform_2(%arg0: i32) -> (i32, i32) {
    %c0_i32 = arith.constant 0 : i32
    %c0_i32_0 = arith.constant 0 : i32
    return %arg0, %c0_i32 : i32, i32
  }
}

</mosaic_0001>

<llo_original>
// kernel: tpu_custom_call.1
$region0: #{tpu_custom_call.1}
  #allocation0 [shape = 'u32[]', space=smem, size = 0x4, offset = 0x4, fixed_abs, tag = 'smem constant byte address 0x4 - core index']
  #allocation1 [shape = 'u32[72,128]{1,0:T(1,128)}', space=vmem, size = 0x9000, scoped, tag = 'internal scratch']
  %s0 = inlined_call_operand.hbm [shape: f32[8,128], index: 0, kind: input, shape index: {}]
  %s1 = inlined_call_operand.hbm [shape: f32[2], index: 1, kind: input, shape index: {}]
  %s2 = inlined_call_operand.hbm [shape: f32[8,128], index: 2, kind: output, shape index: {}]
  %s3 = sld [smem:[#allocation0]]
  $region26: #{tpu_custom_call.1} parent=0
    _
  %s5 = ssub.s32 1, %s3
  %s6 = scalar_select 0, %s5, %s3
  $region1: #{tpu_custom_call.1} parent=0
    #allocation2 [shape = 'u8[4096]{0}', space=vmem, size = 0x1000, scoped, tag = 'input window, operand 0, single buffered']
    #allocation3 [shape = 's32[1]{0}', space=sflag, size = 0x4, scoped, tag = 'scoped memory for tpu_custom_call.1']
    #allocation4 [shape = 's32[1]{0}', space=sflag, size = 0x4, scoped, tag = 'scoped memory for tpu_custom_call.1']
    #allocation5 [shape = 's32[1]{0}', space=sflag, size = 0x4, scoped, tag = 'scoped memory for tpu_custom_call.1']
    #allocation6 [shape = 'u8[512]{0}', space=smem, size = 0x200, scoped, tag = 'input window, operand 1, single buffered']
    #allocation7 [shape = 'u8[4096]{0}', space=vmem, size = 0x1000, scoped, tag = 'output window, operand 0, single buffered']
    %7 = vsyncpa [#allocation3], 0
    %8 = vsyncpa [#allocation5], 0
    %9 = vsyncpa [#allocation4], 0
    // Predicated region
    $region2: #{tpu_custom_call.1} parent=1 // pred_check
      _
    $region3: #{tpu_custom_call.1} parent=1 // pred_check_branch
      %11 = sbr.rel (0) target = $region5
    $region4: #{tpu_custom_call.1} parent=1 // pred_region
      %13 = vsyncadd [#allocation3], 0
      %s15 = sshll.u32 %s0, 4
      %s16 = int_to_ptr.hbm [resolvable:$true] %s15
      %s17 = sshll.u32 [#allocation2], 4
      %s18 = int_to_ptr.vmem [resolvable:$true] %s17
      %20 = dma.hbm_to_vmem [thread:$0]  %s16, 128, %s18, [#allocation3]
    $region5: #{tpu_custom_call.1} parent=1 // pred_fallthru
      _
    // Predicated region
    $region6: #{tpu_custom_call.1} parent=1 // pred_check
      _
    $region7: #{tpu_custom_call.1} parent=1 // pred_check_branch
      %22 = sbr.rel (0) target = $region9
    $region8: #{tpu_custom_call.1} parent=1 // pred_region
      %24 = vsyncadd [#allocation5], 0
      %s26 = sshll.u32 %s1, 4
      %s27 = int_to_ptr.hbm [resolvable:$true] %s26
      %29 = dma.hbm_to_smem %s27, 16, [#allocation6], [#allocation5]
    $region9: #{tpu_custom_call.1} parent=1 // pred_fallthru
      _
    // Predicated region
    $region10: #{tpu_custom_call.1} parent=1 // pred_check
      _
    $region11: #{tpu_custom_call.1} parent=1 // pred_check_branch
      %31 = sbr.rel (0) target = $region13
    $region12: #{tpu_custom_call.1} parent=1 // pred_region
      %33 = dma.done [#allocation3], 128
    $region13: #{tpu_custom_call.1} parent=1 // pred_fallthru
      _
    // Predicated region
    $region14: #{tpu_custom_call.1} parent=1 // pred_check
      _
    $region15: #{tpu_custom_call.1} parent=1 // pred_check_branch
      %35 = sbr.rel (0) target = $region17
    $region16: #{tpu_custom_call.1} parent=1 // pred_region
      %37 = dma.done [#allocation5], 16
    $region17: #{tpu_custom_call.1} parent=1 // pred_fallthru
      _
    %38 = sfence
    %s39 = sld [smem:[#allocation6]]
    %s40 = sld [smem:[#allocation6 + $0x1]]
    %v41 = vld [vmem:[#allocation2] sm:$0xff]
    %v42 = vstv %s39
    %v43 = vmul.f32 %v41, %v42
    %v44 = vstv %s40
    %v45 = vadd.f32 %v43, %v44
    %46 = vst [vmem:[#allocation7] sm:$0xff] %v45
    // Predicated region
    $region18: #{tpu_custom_call.1} parent=1 // pred_check
      _
    $region19: #{tpu_custom_call.1} parent=1 // pred_check_branch
      %48 = sbr.rel (0) target = $region21
    $region20: #{tpu_custom_call.1} parent=1 // pred_region
      %50 = vsyncadd [#allocation4], 0
      %s52 = sshll.u32 [#allocation7], 4
      %s53 = int_to_ptr.vmem [resolvable:$true] %s52
      %s54 = sshll.u32 %s2, 4
      %s55 = int_to_ptr.hbm [resolvable:$true] %s54
      %57 = dma.vmem_to_hbm [thread:$0]  %s53, 128, %s55, [#allocation4]
    $region21: #{tpu_custom_call.1} parent=1 // pred_fallthru
      _
    // Predicated region
    $region22: #{tpu_custom_call.1} parent=1 // pred_check
      _
    $region23: #{tpu_custom_call.1} parent=1 // pred_check_branch
      %59 = sbr.rel (0) target = $region25
    $region24: #{tpu_custom_call.1} parent=1 // pred_region
      %61 = dma.done [#allocation4], 128
    $region25: #{tpu_custom_call.1} parent=1 // pred_fallthru
      _
    %62 = vsyncpa [#allocation3], 1
    %63 = vsyncpa [#allocation4], 1
    %64 = vsyncpa [#allocation5], 1

</llo_original>
